<compile_context>
chip_gen: v7x
topology: tpu7x:2x2x1
jax: 0.10.0
libtpu: 0.0.40
codegen_flags: <defaults>
</compile_context>

<pallas_src>
import functools

import jax
import jax.numpy as jnp
from jax.experimental import pallas as pl
from jax.experimental.pallas import tpu as pltpu


# ---------------------------------------------------------------------------
# Kernel helpers
# ---------------------------------------------------------------------------

def _maybe_cast_for_mxu(x, matmul_dtype):
    """Cast matmul operands down to the MXU dtype in-register (no HBM pass)."""
    if matmul_dtype is None:
        return x
    if jnp.dtype(x.dtype).itemsize > jnp.dtype(matmul_dtype).itemsize:
        return x.astype(matmul_dtype)
    return x


def _layernorm(x, gamma, beta, eps, h_true, mask_lanes):
    """LayerNorm over the lane axis; `h_true` is the real (unpadded) width.

    Variance uses the centered values (numerically safe).  When the feature
    axis is padded to a lane multiple, the padded lanes of `x` are exactly 0
    (zero weight columns / bias / residual), so the mean is already correct;
    only the centered values need masking before the variance reduction.
    """
    inv_h = 1.0 / h_true
    mean = jnp.sum(x, axis=-1, keepdims=True) * inv_h
    xc = x - mean
    if mask_lanes:
        lane = jax.lax.broadcasted_iota(jnp.int32, x.shape, 1)
        xc = jnp.where(lane < h_true, xc, 0.0)
    var = jnp.sum(xc * xc, axis=-1, keepdims=True) * inv_h
    y = xc * jax.lax.rsqrt(var + eps)
    return y * gamma + beta


# ---------------------------------------------------------------------------
# Kernels
# ---------------------------------------------------------------------------

def _ffd_output_kernel(h_ref, res_ref, w_ref, b_ref, gamma_ref, beta_ref,
                       o_ref, *, eps, h_true, mask_lanes, matmul_dtype):
    """Resident-weight path: full I in one MXU matmul per row tile."""
    a = _maybe_cast_for_mxu(h_ref[...], matmul_dtype)
    w = _maybe_cast_for_mxu(w_ref[...], matmul_dtype)
    x = jnp.dot(a, w, preferred_element_type=jnp.float32)
    x = x + b_ref[...].astype(jnp.float32)

    # Dropout: identity in eval mode.
    # TODO(synk): training-mode dropout (pltpu.prng_random_bits mask) not emitted.

    x = x + res_ref[...].astype(jnp.float32)

    y = _layernorm(x,
                   gamma_ref[...].astype(jnp.float32),
                   beta_ref[...].astype(jnp.float32),
                   eps, h_true, mask_lanes)
    o_ref[...] = y.astype(o_ref.dtype)


def _ffd_output_kernel_ktiled(h_ref, res_ref, w_ref, b_ref, gamma_ref, beta_ref,
                              o_ref, acc_ref, *, eps, h_true, mask_lanes,
                              matmul_dtype):
    """K-tiled path: accumulate partial dots over the intermediate axis;
    bias / residual / LayerNorm run only on the last k step."""
    k = pl.program_id(1)

    @pl.when(k == 0)
    def _():
        acc_ref[...] = jnp.zeros_like(acc_ref)

    a = _maybe_cast_for_mxu(h_ref[...], matmul_dtype)
    w = _maybe_cast_for_mxu(w_ref[...], matmul_dtype)
    acc_ref[...] += jnp.dot(a, w, preferred_element_type=jnp.float32)

    @pl.when(k == pl.num_programs(1) - 1)
    def _():
        x = (acc_ref[...]
             + b_ref[...].astype(jnp.float32)
             + res_ref[...].astype(jnp.float32))
        y = _layernorm(x,
                       gamma_ref[...].astype(jnp.float32),
                       beta_ref[...].astype(jnp.float32),
                       eps, h_true, mask_lanes)
        o_ref[...] = y.astype(o_ref.dtype)


# ---------------------------------------------------------------------------
# Wrapper
# ---------------------------------------------------------------------------

def _round_up(x, m):
    return ((x + m - 1) // m) * m


def _vmem_capacity_bytes():
    try:
        return int(pltpu.get_tpu_info().vmem_capacity_bytes)
    except Exception:
        return 64 << 20  # conservative: v7x per-TensorCore VMEM


def ffd_output(hidden_states, input_tensor, w, b, gamma, beta, *,
               eps=1e-12, block_rows=None, matmul_dtype=jnp.bfloat16):
    """Fused dense + residual + LayerNorm.

    hidden_states: [..., I], input_tensor: [..., H], w: [I, H],
    b/gamma/beta: [H].  Output has input_tensor's dtype; for bandwidth-bound
    parts (v6e/v7x) pass bf16 residual/activations to halve HBM traffic —
    all LayerNorm math stays f32 inside the kernel regardless.
    """
    orig_shape = hidden_states.shape
    if hidden_states.ndim != 2:
        hidden_states = hidden_states.reshape(-1, orig_shape[-1])
        input_tensor = input_tensor.reshape(-1, input_tensor.shape[-1])

    M, I = hidden_states.shape
    H = input_tensor.shape[-1]
    out_dtype = input_tensor.dtype

    # Lane-dense feature axis: pad H to a multiple of 128 when needed so the
    # output stores are unmasked vst (biggest measured single lever).
    Hp = H if H % 128 == 0 else _round_up(H, 128)
    mask_lanes = (Hp != H)
    if mask_lanes:
        pad = Hp - H
        input_tensor = jnp.pad(input_tensor, ((0, 0), (0, pad)))
        w = jnp.pad(w, ((0, 0), (0, pad)))
        b = jnp.pad(b, (0, pad))
        gamma = jnp.pad(gamma, (0, pad))
        beta = jnp.pad(beta, (0, pad))

    b2 = b.reshape(1, Hp).astype(jnp.float32)
    gamma2 = gamma.reshape(1, Hp).astype(jnp.float32)
    beta2 = beta.reshape(1, Hp).astype(jnp.float32)

    act_isz = jnp.dtype(hidden_states.dtype).itemsize
    res_isz = jnp.dtype(input_tensor.dtype).itemsize
    out_isz = jnp.dtype(out_dtype).itemsize
    w_isz = jnp.dtype(w.dtype).itemsize

    vmem_cap = _vmem_capacity_bytes()

    # ---- choose resident-weight vs K-tiled path -----------------------------
    weight_bytes = I * Hp * w_isz
    k_tile = None
    if weight_bytes > (24 << 20):
        for cand in (4096, 2048, 1024, 512, 256, 128):
            if I % cand == 0 and cand < I:
                k_tile = cand
                break
        # TODO(synk): if no clean 128-multiple divisor of I exists for a huge
        # weight we fall back to the resident path (may exceed VMEM).

    # ---- VMEM accounting (per row-tile-row and fixed/resident) --------------
    ln_scratch = 3 * Hp * 4  # f32 dot result + LN temporaries (internal scratch)
    if k_tile is None:
        per_row = (2 * I * act_isz + 2 * Hp * res_isz + 2 * Hp * out_isz
                   + ln_scratch)
        fixed = I * Hp * w_isz + 3 * Hp * 4
    else:
        per_row = (2 * k_tile * act_isz + 2 * Hp * res_isz + 2 * Hp * out_isz
                   + ln_scratch + Hp * 4)          # + f32 accumulator scratch
        fixed = 2 * k_tile * Hp * w_isz + 3 * Hp * 4

    # ---- row tile size -------------------------------------------------------
    if block_rows is None:
        budget = int(0.7 * vmem_cap) - fixed
        cap_rows = max(budget // max(per_row, 1), 16)
        # Target ~8 grid steps over rows (>= 4 per v7x TensorCore) so the
        # pipeline always has a prefetch target; allow up to 1024-row tiles
        # on big-VMEM parts (v5e/v6e).
        target = _round_up(max(pl.cdiv(M, 8), 16), 16)
        block_rows = int(min(target, 1024, cap_rows))
        block_rows = max(16, (block_rows // 16) * 16)
    block_rows = min(block_rows, M)

    grid_m = pl.cdiv(M, block_rows)

    vmem_bytes = fixed + block_rows * per_row
    vmem_limit = int(min(max(int(1.25 * vmem_bytes) + (4 << 20), 32 << 20),
                         int(0.9 * vmem_cap)))

    cost = pl.CostEstimate(
        flops=2 * M * I * H,
        transcendentals=0,
        bytes_accessed=(M * I * act_isz + M * Hp * res_isz + I * Hp * w_isz
                        + M * Hp * out_isz + 3 * Hp * 4))

    # Constant-index operands: single buffer (no point double-buffering them).
    resident = functools.partial(pl.BlockSpec, pipeline_mode=pl.Buffered(1))

    if k_tile is None:
        kernel = functools.partial(_ffd_output_kernel, eps=eps, h_true=H,
                                   mask_lanes=mask_lanes,
                                   matmul_dtype=matmul_dtype)
        out = pl.pallas_call(
            kernel,
            out_shape=jax.ShapeDtypeStruct((M, Hp), out_dtype),
            grid_spec=pltpu.PrefetchScalarGridSpec(
                num_scalar_prefetch=0,
                grid=(grid_m,),
                in_specs=[
                    pl.BlockSpec((block_rows, I), lambda i: (i, 0)),   # activations
                    pl.BlockSpec((block_rows, Hp), lambda i: (i, 0)),  # residual
                    resident((I, Hp), lambda i: (0, 0)),               # weight
                    resident((1, Hp), lambda i: (0, 0)),               # bias
                    resident((1, Hp), lambda i: (0, 0)),               # LN gamma
                    resident((1, Hp), lambda i: (0, 0)),               # LN beta
                ],
                out_specs=pl.BlockSpec((block_rows, Hp), lambda i: (i, 0)),
            ),
            compiler_params=pltpu.CompilerParams(
                dimension_semantics=("parallel",),
                vmem_limit_bytes=vmem_limit),
            cost_estimate=cost,
        )(hidden_states, input_tensor, w, b2, gamma2, beta2)
    else:
        kernel = functools.partial(_ffd_output_kernel_ktiled, eps=eps, h_true=H,
                                   mask_lanes=mask_lanes,
                                   matmul_dtype=matmul_dtype)
        out = pl.pallas_call(
            kernel,
            out_shape=jax.ShapeDtypeStruct((M, Hp), out_dtype),
            grid_spec=pltpu.PrefetchScalarGridSpec(
                num_scalar_prefetch=0,
                grid=(grid_m, I // k_tile),
                in_specs=[
                    pl.BlockSpec((block_rows, k_tile), lambda i, k: (i, k)),
                    pl.BlockSpec((block_rows, Hp), lambda i, k: (i, 0)),
                    pl.BlockSpec((k_tile, Hp), lambda i, k: (k, 0)),
                    resident((1, Hp), lambda i, k: (0, 0)),
                    resident((1, Hp), lambda i, k: (0, 0)),
                    resident((1, Hp), lambda i, k: (0, 0)),
                ],
                out_specs=pl.BlockSpec((block_rows, Hp), lambda i, k: (i, 0)),
                scratch_shapes=[pltpu.VMEM((block_rows, Hp), jnp.float32)],
            ),
            compiler_params=pltpu.CompilerParams(
                dimension_semantics=("parallel", "arbitrary"),
                vmem_limit_bytes=vmem_limit),
            cost_estimate=cost,
        )(hidden_states, input_tensor, w, b2, gamma2, beta2)

    if mask_lanes:
        out = out[:, :H]
    if len(orig_shape) != 2:
        out = out.reshape(*orig_shape[:-1], H)
    return out


# ---------------------------------------------------------------------------
# Demo / correctness check
# ---------------------------------------------------------------------------

if __name__ == "__main__":
    # Small shapes consistent with the module: batch=2, seq=16,
    # intermediate_size=64, hidden_size=32.
    B, S = 2, 16
    intermediate_size = 64
    hidden_size = 32
    layer_norm_eps = 1e-12

    key = jax.random.PRNGKey(0)
    k_h, k_res, k_w, k_b = jax.random.split(key, 4)

    hidden_states = jax.random.normal(k_h, (B, S, intermediate_size), jnp.float32)
    input_tensor = jax.random.normal(k_res, (B, S, hidden_size), jnp.float32)

    # Deterministic synthetic parameters (no checkpoint load).
    # PyTorch nn.Linear stores weight as [hidden, intermediate]; we keep the
    # transposed layout [intermediate, hidden] so the kernel does x @ W.
    w = jax.random.normal(k_w, (intermediate_size, hidden_size), jnp.float32) * 0.02
    b = jax.random.normal(k_b, (hidden_size,), jnp.float32) * 0.02
    gamma = jnp.ones((hidden_size,), jnp.float32)
    beta = jnp.zeros((hidden_size,), jnp.float32)

    out = ffd_output(hidden_states, input_tensor, w, b, gamma, beta,
                     eps=layer_norm_eps)
    jax.block_until_ready(out)

    # Pure-JAX reference using the same matmul precision policy
    # (bf16 operands, f32 accumulation) so the check isolates kernel math.
    h2d = hidden_states.reshape(B * S, intermediate_size)
    res2d = input_tensor.reshape(B * S, hidden_size)
    ref = jnp.dot(h2d.astype(jnp.bfloat16), w.astype(jnp.bfloat16),
                  preferred_element_type=jnp.float32) + b
    ref = ref + res2d
    mu = ref.mean(-1, keepdims=True)
    var = ((ref - mu) ** 2).mean(-1, keepdims=True)
    ref = (ref - mu) * jax.lax.rsqrt(var + layer_norm_eps) * gamma + beta
    ref = ref.reshape(B, S, hidden_size)

    assert jnp.allclose(out, ref, atol=1e-3, rtol=1e-3), "mismatch vs reference"
    print("KERNEL_OK")
</pallas_src>

<mosaic_0001>
module attributes {stable_mosaic.version = 11 : i64} {
  func.func @_ffd_output_kernel(%arg0: i32, %arg1: memref<16x64xf32, #tpu.memory_space<vmem>>, %arg2: memref<16x128xf32, #tpu.memory_space<vmem>>, %arg3: memref<64x128xf32, #tpu.memory_space<vmem>>, %arg4: memref<1x128xf32, #tpu.memory_space<vmem>>, %arg5: memref<1x128xf32, #tpu.memory_space<vmem>>, %arg6: memref<1x128xf32, #tpu.memory_space<vmem>>, %arg7: memref<16x128xf32, #tpu.memory_space<vmem>>) attributes {dimension_semantics = [#tpu.dimension_semantics<parallel>], iteration_bounds = array<i64: 2>, scalar_prefetch = 0 : i64, scratch_operands = 0 : i64, tpu.core_type = #tpu.core_type<tc>, window_params = [{transform_indices = @transform_0, window_bounds = array<i64: 16, 64>}, {transform_indices = @transform_1, window_bounds = array<i64: 16, 128>}, {pipeline_mode = #tpu.pipeline_mode<synchronous>, transform_indices = @transform_2, window_bounds = array<i64: 64, 128>}, {pipeline_mode = #tpu.pipeline_mode<synchronous>, transform_indices = @transform_3, window_bounds = array<i64: 1, 128>}, {pipeline_mode = #tpu.pipeline_mode<synchronous>, transform_indices = @transform_4, window_bounds = array<i64: 1, 128>}, {pipeline_mode = #tpu.pipeline_mode<synchronous>, transform_indices = @transform_5, window_bounds = array<i64: 1, 128>}, {transform_indices = @transform_6, window_bounds = array<i64: 16, 128>}]} {
    %c0 = arith.constant 0 : index
    %c0_0 = arith.constant 0 : index
    %0 = vector.load %arg1[%c0, %c0_0] : memref<16x64xf32, #tpu.memory_space<vmem>>, vector<16x64xf32>
    %1 = arith.truncf %0 : vector<16x64xf32> to vector<16x64xbf16>
    %c0_1 = arith.constant 0 : index
    %c0_2 = arith.constant 0 : index
    %2 = vector.load %arg3[%c0_1, %c0_2] : memref<64x128xf32, #tpu.memory_space<vmem>>, vector<64x128xf32>
    %3 = arith.truncf %2 : vector<64x128xf32> to vector<64x128xbf16>
    %cst = arith.constant dense<0.000000e+00> : vector<16x128xf32>
    %4 = tpu.matmul %1, %3, %cst {dimension_numbers = #tpu.dot_dimension_numbers<[1], [0], [0], [1], [0, 0, 1, 1], [], []>} : vector<16x64xbf16>, vector<64x128xbf16>, vector<16x128xf32> -> vector<16x128xf32>
    %c0_3 = arith.constant 0 : index
    %c0_4 = arith.constant 0 : index
    %5 = vector.load %arg4[%c0_3, %c0_4] : memref<1x128xf32, #tpu.memory_space<vmem>>, vector<1x128xf32>
    %6 = vector.broadcast %5 : vector<1x128xf32> to vector<16x128xf32>
    %7 = arith.addf %4, %6 : vector<16x128xf32>
    %c0_5 = arith.constant 0 : index
    %c0_6 = arith.constant 0 : index
    %8 = vector.load %arg2[%c0_5, %c0_6] : memref<16x128xf32, #tpu.memory_space<vmem>>, vector<16x128xf32>
    %9 = arith.addf %7, %8 : vector<16x128xf32>
    %c0_7 = arith.constant 0 : index
    %c0_8 = arith.constant 0 : index
    %10 = vector.load %arg5[%c0_7, %c0_8] : memref<1x128xf32, #tpu.memory_space<vmem>>, vector<1x128xf32>
    %c0_9 = arith.constant 0 : index
    %c0_10 = arith.constant 0 : index
    %11 = vector.load %arg6[%c0_9, %c0_10] : memref<1x128xf32, #tpu.memory_space<vmem>>, vector<1x128xf32>
    %cst_11 = arith.constant dense<0.000000e+00> : vector<16xf32>
    %12 = vector.multi_reduction <add>, %9, %cst_11 [1] : vector<16x128xf32> to vector<16xf32>
    %13 = vector.shape_cast %12 : vector<16xf32> to vector<16x1xf32>
    %cst_12 = arith.constant 3.125000e-02 : f32
    %14 = vector.broadcast %cst_12 : f32 to vector<16x1xf32>
    %15 = arith.mulf %13, %14 : vector<16x1xf32>
    %16 = vector.broadcast %15 : vector<16x1xf32> to vector<16x128xf32>
    %17 = arith.subf %9, %16 : vector<16x128xf32>
    %18 = tpu.iota {dimensions = array<i32: 1>} : vector<16x128xi32>
    %c32_i32 = arith.constant 32 : i32
    %19 = vector.broadcast %c32_i32 : i32 to vector<16x128xi32>
    %20 = arith.cmpi slt, %18, %19 : vector<16x128xi32>
    %cst_13 = arith.constant 0.000000e+00 : f32
    %21 = vector.broadcast %cst_13 : f32 to vector<16x128xf32>
    %22 = arith.select %20, %17, %21 : vector<16x128xi1>, vector<16x128xf32>
    %23 = arith.mulf %22, %22 : vector<16x128xf32>
    %cst_14 = arith.constant dense<0.000000e+00> : vector<16xf32>
    %24 = vector.multi_reduction <add>, %23, %cst_14 [1] : vector<16x128xf32> to vector<16xf32>
    %25 = vector.shape_cast %24 : vector<16xf32> to vector<16x1xf32>
    %cst_15 = arith.constant 3.125000e-02 : f32
    %26 = vector.broadcast %cst_15 : f32 to vector<16x1xf32>
    %27 = arith.mulf %25, %26 : vector<16x1xf32>
    %cst_16 = arith.constant 9.99999996E-13 : f32
    %28 = vector.broadcast %cst_16 : f32 to vector<16x1xf32>
    %29 = arith.addf %27, %28 : vector<16x1xf32>
    %30 = math.rsqrt %29 : vector<16x1xf32>
    %31 = vector.broadcast %30 : vector<16x1xf32> to vector<16x128xf32>
    %32 = arith.mulf %22, %31 : vector<16x128xf32>
    %33 = vector.broadcast %10 : vector<1x128xf32> to vector<16x128xf32>
    %34 = arith.mulf %32, %33 : vector<16x128xf32>
    %35 = vector.broadcast %11 : vector<1x128xf32> to vector<16x128xf32>
    %36 = arith.addf %34, %35 : vector<16x128xf32>
    %c0_17 = arith.constant 0 : index
    %c0_18 = arith.constant 0 : index
    %37 = vector.load %arg7[%c0_17, %c0_18] : memref<16x128xf32, #tpu.memory_space<vmem>>, vector<16x128xf32>
    tpu.vector_store %arg7[%c0_17, %c0_18], %36 {strides = array<i32>} : memref<16x128xf32, #tpu.memory_space<vmem>>, vector<16x128xf32>,
    return
  }
  func.func @transform_0(%arg0: i32) -> (i32, i32) {
    %c0_i32 = arith.constant 0 : i32
    %c0_i32_0 = arith.constant 0 : i32
    return %arg0, %c0_i32 : i32, i32
  }
  func.func @transform_1(%arg0: i32) -> (i32, i32) {
    %c0_i32 = arith.constant 0 : i32
    %c0_i32_0 = arith.constant 0 : i32
    return %arg0, %c0_i32 : i32, i32
  }
  func.func @transform_2(%arg0: i32) -> (i32, i32) {
    %c0_i32 = arith.constant 0 : i32
    %c0_i32_0 = arith.constant 0 : i32
    %c0_i32_1 = arith.constant 0 : i32
    return %c0_i32, %c0_i32_0 : i32, i32
  }
  func.func @transform_3(%arg0: i32) -> (i32, i32) {
    %c0_i32 = arith.constant 0 : i32
    %c0_i32_0 = arith.constant 0 : i32
    %c0_i32_1 = arith.constant 0 : i32
    return %c0_i32, %c0_i32_0 : i32, i32
  }
  func.func @transform_4(%arg0: i32) -> (i32, i32) {
    %c0_i32 = arith.constant 0 : i32
    %c0_i32_0 = arith.constant 0 : i32
    %c0_i32_1 = arith.constant 0 : i32
    return %c0_i32, %c0_i32_0 : i32, i32
  }
  func.func @transform_5(%arg0: i32) -> (i32, i32) {
    %c0_i32 = arith.constant 0 : i32
    %c0_i32_0 = arith.constant 0 : i32
    %c0_i32_1 = arith.constant 0 : i32
    return %c0_i32, %c0_i32_0 : i32, i32
  }
  func.func @transform_6(%arg0: i32) -> (i32, i32) {
    %c0_i32 = arith.constant 0 : i32
    %c0_i32_0 = arith.constant 0 : i32
    return %arg0, %c0_i32 : i32, i32
  }
}

</mosaic_0001>

<llo_original>
// kernel: tpu_custom_call.1
$region0: #{tpu_custom_call.1}
  #allocation0 [shape = 'u32[]', space=smem, size = 0x4, offset = 0x4, fixed_abs, tag = 'smem constant byte address 0x4 - core index']
  #allocation1 [shape = 'u32[144,128]{1,0:T(1,128)}', space=vmem, size = 0x12000, scoped, tag = 'internal scratch']
  %s0 = inlined_call_operand.hbm [shape: f32[32,64], index: 0, kind: input, shape index: {}]
  %s1 = inlined_call_operand.hbm [shape: f32[32,128], index: 1, kind: input, shape index: {}]
  %s2 = inlined_call_operand.hbm [shape: f32[64,128], index: 2, kind: input, shape index: {}]
  %s3 = inlined_call_operand.vmem [shape: f32[1,128], index: 3, kind: input, shape index: {}]
  %s4 = inlined_call_operand.vmem [shape: f32[1,128], index: 4, kind: input, shape index: {}]
  %s5 = inlined_call_operand.vmem [shape: f32[1,128], index: 5, kind: input, shape index: {}]
  %s6 = inlined_call_operand.hbm [shape: f32[32,128], index: 6, kind: output, shape index: {}]
  %s7 = sld [smem:[#allocation0]]
  $region69: #{tpu_custom_call.1} parent=0
    _
  %s9 = ssub.s32 1, %s7
  %s10 = scalar_select 0, %s9, %s7
  $region1: #{tpu_custom_call.1} parent=0
    #allocation2 [shape = 'u8[16384]{0}', space=vmem, size = 0x4000, scoped, tag = 'input window, operand 0']
    #allocation3 [shape = 's32[2]{0}', space=sflag, size = 0x8, scoped, tag = 'scoped memory for tpu_custom_call.1']
    #allocation4 [shape = 's32[2]{0}', space=sflag, size = 0x8, scoped, tag = 'scoped memory for tpu_custom_call.1']
    #allocation5 [shape = 'u8[16384]{0}', space=vmem, size = 0x4000, scoped, tag = 'input window, operand 1']
    #allocation6 [shape = 's32[2]{0}', space=sflag, size = 0x8, scoped, tag = 'scoped memory for tpu_custom_call.1']
    #allocation7 [shape = 'u8[32768]{0}', space=vmem, size = 0x8000, scoped, tag = 'input window, operand 2, single buffered']
    #allocation8 [shape = 'u8[16384]{0}', space=vmem, size = 0x4000, scoped, tag = 'output window, operand 0']
    %11 = vsyncpa [#allocation3], 0
    %s12 = scalar_lea.sflag [#allocation3], 1
    %13 = vsyncpa %s12, 0
    %14 = vsyncpa [#allocation6], 0
    %s15 = scalar_lea.sflag [#allocation6], 1
    %16 = vsyncpa %s15, 0
    %17 = vsyncpa [#allocation4], 0
    %s18 = scalar_lea.sflag [#allocation4], 1
    %19 = vsyncpa %s18, 0
    loop: start=0, step=1, limit=4
    $region2: #{tpu_custom_call.1} parent=1 // loop_pre_header
      _
    $region3: #{tpu_custom_call.1} parent=1 // loop_header
      %s21 = sphi 0, %s25
      %p22 = scmp.ge.s32.totalorder %s21, 4
      %s31 = sphi 0, %s33
      %s34 = sphi 0, %s31
      %s35 = sphi 0, %s34
      %s51 = sphi 0, %s35
      %s57 = sphi 0, %s59
      %s60 = sphi 0, %s57
      %s61 = sphi 0, %s60
      %s77 = sphi 0, %s61
      %s81 = sphi 0, %s81
      %s83 = sphi 0, %s81
      %s84 = sphi 0, %s83
      %s98 = sphi 0, %s84
      %s102 = sphi 0, %s102
      %s104 = sphi 0, %s102
      %s105 = sphi 0, %s104
      %s119 = sphi 0, %s105
      %s123 = sphi 0, %s123
      %s125 = sphi 0, %s123
      %s126 = sphi 0, %s125
      %s140 = sphi 0, %s126
      %s144 = sphi 0, %s144
      %s146 = sphi 0, %s144
      %s147 = sphi 0, %s146
      %s161 = sphi 0, %s147
      %s167 = sphi 0, %s169
      %s170 = sphi 0, %s167
      %s171 = sphi 0, %s170
      %s187 = sphi 0, %s171
    $region4: #{tpu_custom_call.1} parent=1 // loop_header_branch
      %24 = sbr.rel (%p22) target = $region8
    $region5: #{tpu_custom_call.1} parent=1 // loop_body
      %s26 = ssub.s32 %s21, 1
      %s27 = ssub.s32 %s21, 2
      %s28 = sadd.s32 %s21, 1
      %s29 = ssub.s32 %s21, %s28
      %p30 = scmp.eq.s32.totalorder %s29, 0
      %s32 = sadd.s32 %s31, 1
      %s33 = scalar_select %p30, %s31, %s32
      %p36 = pneg %p30
      %p37 = scmp.eq.s32.totalorder %s21, 1
      %p38 = por %p36, %p37
      %p39 = scmp.ne.s32.totalorder %s31, %s34
      %p40 = scmp.eq.s32.totalorder %s21, 0
      %p41 = por %p39, %p40
      %p42 = scmp.ne.s32.totalorder %s31, %s34
      %p43 = scmp.eq.s32.totalorder %s26, 1
      %p44 = por %p42, %p43
      %p45 = scmp.ne.s32.totalorder %s34, %s35
      %p46 = scmp.eq.s32.totalorder %s26, 0
      %p47 = por %p45, %p46
      %p48 = scmp.ne.s32.totalorder %s34, %s35
      %p49 = scmp.eq.s32.totalorder %s27, 1
      %p50 = por %p48, %p49
      %p52 = scmp.ne.s32.totalorder %s35, %s51
      %p53 = scmp.eq.s32.totalorder %s27, 0
      %p54 = por %p52, %p53
      %s55 = ssub.s32 %s21, %s28
      %p56 = scmp.eq.s32.totalorder %s55, 0
      %s58 = sadd.s32 %s57, 1
      %s59 = scalar_select %p56, %s57, %s58
      %p62 = pneg %p56
      %p63 = scmp.eq.s32.totalorder %s21, 1
      %p64 = por %p62, %p63
      %p65 = scmp.ne.s32.totalorder %s57, %s60
      %p66 = scmp.eq.s32.totalorder %s21, 0
      %p67 = por %p65, %p66
      %p68 = scmp.ne.s32.totalorder %s57, %s60
      %p69 = scmp.eq.s32.totalorder %s26, 1
      %p70 = por %p68, %p69
      %p71 = scmp.ne.s32.totalorder %s60, %s61
      %p72 = scmp.eq.s32.totalorder %s26, 0
      %p73 = por %p71, %p72
      %p74 = scmp.ne.s32.totalorder %s60, %s61
      %p75 = scmp.eq.s32.totalorder %s27, 1
      %p76 = por %p74, %p75
      %p78 = scmp.ne.s32.totalorder %s61, %s77
      %p79 = scmp.eq.s32.totalorder %s27, 0
      %p80 = por %p78, %p79
      %s82 = sadd.s32 %s81, 1
      %p85 = scmp.eq.s32.totalorder %s21, 1
      %p86 = scmp.ne.s32.totalorder %s81, %s83
      %p87 = scmp.eq.s32.totalorder %s21, 0
      %p88 = por %p86, %p87
      %p89 = scmp.ne.s32.totalorder %s81, %s83
      %p90 = scmp.eq.s32.totalorder %s26, 1
      %p91 = por %p89, %p90
      %p92 = scmp.ne.s32.totalorder %s83, %s84
      %p93 = scmp.eq.s32.totalorder %s26, 0
      %p94 = por %p92, %p93
      %p95 = scmp.ne.s32.totalorder %s83, %s84
      %p96 = scmp.eq.s32.totalorder %s27, 1
      %p97 = por %p95, %p96
      %p99 = scmp.ne.s32.totalorder %s84, %s98
      %p100 = scmp.eq.s32.totalorder %s27, 0
      %p101 = por %p99, %p100
      %s103 = sadd.s32 %s102, 1
      %p106 = scmp.eq.s32.totalorder %s21, 1
      %p107 = scmp.ne.s32.totalorder %s102, %s104
      %p108 = scmp.eq.s32.totalorder %s21, 0
      %p109 = por %p107, %p108
      %p110 = scmp.ne.s32.totalorder %s102, %s104
      %p111 = scmp.eq.s32.totalorder %s26, 1
      %p112 = por %p110, %p111
      %p113 = scmp.ne.s32.totalorder %s104, %s105
      %p114 = scmp.eq.s32.totalorder %s26, 0
      %p115 = por %p113, %p114
      %p116 = scmp.ne.s32.totalorder %s104, %s105
      %p117 = scmp.eq.s32.totalorder %s27, 1
      %p118 = por %p116, %p117
      %p120 = scmp.ne.s32.totalorder %s105, %s119
      %p121 = scmp.eq.s32.totalorder %s27, 0
      %p122 = por %p120, %p121
      %s124 = sadd.s32 %s123, 1
      %p127 = scmp.eq.s32.totalorder %s21, 1
      %p128 = scmp.ne.s32.totalorder %s123, %s125
      %p129 = scmp.eq.s32.totalorder %s21, 0
      %p130 = por %p128, %p129
      %p131 = scmp.ne.s32.totalorder %s123, %s125
      %p132 = scmp.eq.s32.totalorder %s26, 1
      %p133 = por %p131, %p132
      %p134 = scmp.ne.s32.totalorder %s125, %s126
      %p135 = scmp.eq.s32.totalorder %s26, 0
      %p136 = por %p134, %p135
      %p137 = scmp.ne.s32.totalorder %s125, %s126
      %p138 = scmp.eq.s32.totalorder %s27, 1
      %p139 = por %p137, %p138
      %p141 = scmp.ne.s32.totalorder %s126, %s140
      %p142 = scmp.eq.s32.totalorder %s27, 0
      %p143 = por %p141, %p142
      %s145 = sadd.s32 %s144, 1
      %p148 = scmp.eq.s32.totalorder %s21, 1
      %p149 = scmp.ne.s32.totalorder %s144, %s146
      %p150 = scmp.eq.s32.totalorder %s21, 0
      %p151 = por %p149, %p150
      %p152 = scmp.ne.s32.totalorder %s144, %s146
      %p153 = scmp.eq.s32.totalorder %s26, 1
      %p154 = por %p152, %p153
      %p155 = scmp.ne.s32.totalorder %s146, %s147
      %p156 = scmp.eq.s32.totalorder %s26, 0
      %p157 = por %p155, %p156
      %p158 = scmp.ne.s32.totalorder %s146, %s147
      %p159 = scmp.eq.s32.totalorder %s27, 1
      %p160 = por %p158, %p159
      %p162 = scmp.ne.s32.totalorder %s147, %s161
      %p163 = scmp.eq.s32.totalorder %s27, 0
      %p164 = por %p162, %p163
      %s165 = ssub.s32 %s21, %s28
      %p166 = scmp.eq.s32.totalorder %s165, 0
      %s168 = sadd.s32 %s167, 1
      %s169 = scalar_select %p166, %s167, %s168
      %p172 = pneg %p166
      %p173 = scmp.eq.s32.totalorder %s21, 1
      %p174 = por %p172, %p173
      %p175 = scmp.ne.s32.totalorder %s167, %s170
      %p176 = scmp.eq.s32.totalorder %s21, 0
      %p177 = por %p175, %p176
      %p178 = scmp.ne.s32.totalorder %s167, %s170
      %p179 = scmp.eq.s32.totalorder %s26, 1
      %p180 = por %p178, %p179
      %p181 = scmp.ne.s32.totalorder %s170, %s171
      %p182 = scmp.eq.s32.totalorder %s26, 0
      %p183 = por %p181, %p182
      %p184 = scmp.ne.s32.totalorder %s170, %s171
      %p185 = scmp.eq.s32.totalorder %s27, 1
      %p186 = por %p184, %p185
      %p188 = scmp.ne.s32.totalorder %s171, %s187
      %p189 = scmp.eq.s32.totalorder %s27, 0
      %p190 = por %p188, %p189
      %p191 = scmp.le.s32.totalorder 1, %s21
      %p192 = scmp.lt.s32.totalorder %s21, 3
      %p193 = pnand %p191, %p192
      %p194 = pneg %p193
      // Predicated region
      $region9: #{tpu_custom_call.1} parent=5 // pred_check
        _
      $region10: #{tpu_custom_call.1} parent=5 // pred_check_branch
        %196 = sbr.rel (%p193) target = $region12
      $region11: #{tpu_custom_call.1} parent=5 // pred_region
        %s197 = ssub.s32 %s21, 1
        // Predicated region
        $region13: #{tpu_custom_call.1} parent=11 // pred_check
          %p198 = pneg %p94
        $region14: #{tpu_custom_call.1} parent=11 // pred_check_branch
          %200 = sbr.rel (%p198) target = $region16
        $region15: #{tpu_custom_call.1} parent=11 // pred_region
          %s202 = ssub.s32 1024, 1024
          %203 = vsyncadd [#allocation6], %s202
          %s204 = sshll.u32 [#allocation7], 4
          %s205 = int_to_ptr.vmem [resolvable:$true] %s204
          %210 = dma.hbm_to_vmem [thread:$0]  %s2, 1024, %s205, [#allocation6], 128, 128, 8
        $region16: #{tpu_custom_call.1} parent=11 // pred_fallthru
          _
        // Predicated region
        $region17: #{tpu_custom_call.1} parent=11 // pred_check
          %p211 = pneg %p115
        $region18: #{tpu_custom_call.1} parent=11 // pred_check_branch
          %213 = sbr.rel (%p211) target = $region20
        $region19: #{tpu_custom_call.1} parent=11 // pred_region
          _
        $region20: #{tpu_custom_call.1} parent=11 // pred_fallthru
          _
        // Predicated region
        $region21: #{tpu_custom_call.1} parent=11 // pred_check
          %p214 = pneg %p136
        $region22: #{tpu_custom_call.1} parent=11 // pred_check_branch
          %216 = sbr.rel (%p214) target = $region24
        $region23: #{tpu_custom_call.1} parent=11 // pred_region
          _
        $region24: #{tpu_custom_call.1} parent=11 // pred_fallthru
          _
        // Predicated region
        $region25: #{tpu_custom_call.1} parent=11 // pred_check
          %p217 = pneg %p157
        $region26: #{tpu_custom_call.1} parent=11 // pred_check_branch
          %219 = sbr.rel (%p217) target = $region28
        $region27: #{tpu_custom_call.1} parent=11 // pred_region
          _
        $region28: #{tpu_custom_call.1} parent=11 // pred_fallthru
          _
      $region12: #{tpu_custom_call.1} parent=5 // pred_fallthru
        _
      %p220 = scmp.lt.s32.totalorder %s21, 2
      // Predicated region
      $region29: #{tpu_custom_call.1} parent=5 // pred_check
        %p221 = pneg %p220
      $region30: #{tpu_custom_call.1} parent=5 // pred_check_branch
        %223 = sbr.rel (%p221) target = $region32
      $region31: #{tpu_custom_call.1} parent=5 // pred_region
        // Predicated region
        $region33: #{tpu_custom_call.1} parent=31 // pred_check
          %p224 = pneg %p41
        $region34: #{tpu_custom_call.1} parent=31 // pred_check_branch
          %226 = sbr.rel (%p224) target = $region36
        $region35: #{tpu_custom_call.1} parent=31 // pred_region
          %s227 = sand.u32 %s31, 1
          %s228 = scalar_lea.sflag [#allocation3], %s227
          %s229 = sand.u32 %s31, 1
          %s230 = smul.addr %s229, 16
          %s231 = scalar_lea.vmem [#allocation2], %s230
          %s232 = smul.u32 2, %s21
          %s234 = ssub.s32 256, 256
          %235 = vsyncadd %s228, %s234
          %s236 = smul.addr %s232, 128
          %s237 = scalar_lea.hbm %s0, %s236
          %s238 = sshll.u32 %s231, 4
          %s239 = int_to_ptr.vmem [resolvable:$true] %s238
          %244 = dma.hbm_to_vmem [thread:$0]  %s237, 256, %s239, %s228, 128, 128, 8
        $region36: #{tpu_custom_call.1} parent=31 // pred_fallthru
          _
        // Predicated region
        $region37: #{tpu_custom_call.1} parent=31 // pred_check
          %p245 = pneg %p67
        $region38: #{tpu_custom_call.1} parent=31 // pred_check_branch
          %247 = sbr.rel (%p245) target = $region40
        $region39: #{tpu_custom_call.1} parent=31 // pred_region
          %s248 = sand.u32 %s21, 1
          %s249 = scalar_lea.sflag [#allocation6], %s248
          %s250 = sand.u32 %s57, 1
          %s251 = smul.addr %s250, 16
          %s252 = scalar_lea.vmem [#allocation5], %s251
          %s253 = smul.u32 2, %s21
          %s255 = ssub.s32 256, 256
          %256 = vsyncadd %s249, %s255
          %s257 = smul.addr %s253, 128
          %s258 = scalar_lea.hbm %s1, %s257
          %s259 = sshll.u32 %s252, 4
          %s260 = int_to_ptr.vmem [resolvable:$true] %s259
          %265 = dma.hbm_to_vmem [thread:$0]  %s258, 256, %s260, %s249, 128, 128, 8
        $region40: #{tpu_custom_call.1} parent=31 // pred_fallthru
          _
      $region32: #{tpu_custom_call.1} parent=5 // pred_fallthru
        _
      %p266 = scmp.le.s32.totalorder 1, %s21
      %p267 = scmp.lt.s32.totalorder %s21, 3
      %p268 = pnand %p266, %p267
      %p269 = pneg %p268
      // Predicated region
      $region41: #{tpu_custom_call.1} parent=5 // pred_check
        _
      $region42: #{tpu_custom_call.1} parent=5 // pred_check_branch
        %271 = sbr.rel (%p268) target = $region44
      $region43: #{tpu_custom_call.1} parent=5 // pred_region
        %s272 = ssub.s32 %s21, 1
        %s273 = sand.u32 %s34, 1
        %s274 = scalar_lea.sflag [#allocation3], %s273
        %s275 = sand.u32 %s34, 1
        %s276 = smul.addr %s275, 16
        %s277 = scalar_lea.vmem [#allocation2], %s276
        // Predicated region
        $region45: #{tpu_custom_call.1} parent=43 // pred_check
          %p278 = pneg %p47
        $region46: #{tpu_custom_call.1} parent=43 // pred_check_branch
          %280 = sbr.rel (%p278) target = $region48
        $region47: #{tpu_custom_call.1} parent=43 // pred_region
          %281 = dma.done %s274, 256
        $region48: #{tpu_custom_call.1} parent=43 // pred_fallthru
          _
        %s282 = sand.u32 %s26, 1
        %s283 = scalar_lea.sflag [#allocation6], %s282
        %s284 = sand.u32 %s60, 1
        %s285 = smul.addr %s284, 16
        %s286 = scalar_lea.vmem [#allocation5], %s285
        // Predicated region
        $region49: #{tpu_custom_call.1} parent=43 // pred_check
          %p287 = pneg %p73
        $region50: #{tpu_custom_call.1} parent=43 // pred_check_branch
          %289 = sbr.rel (%p287) target = $region52
        $region51: #{tpu_custom_call.1} parent=43 // pred_region
          %290 = dma.done %s283, 256
        $region52: #{tpu_custom_call.1} parent=43 // pred_fallthru
          _
        // Predicated region
        $region53: #{tpu_custom_call.1} parent=43 // pred_check
          %p291 = pneg %p94
        $region54: #{tpu_custom_call.1} parent=43 // pred_check_branch
          %293 = sbr.rel (%p291) target = $region56
        $region55: #{tpu_custom_call.1} parent=43 // pred_region
          %294 = dma.done [#allocation6], 1024
        $region56: #{tpu_custom_call.1} parent=43 // pred_fallthru
          _
        %s295 = sand.u32 %s34, 1
        %s296 = scalar_lea.sflag [#allocation3], %s295
        %s297 = sand.u32 %s34, 1
        %s298 = smul.addr %s297, 16
        %s299 = scalar_lea.vmem [#allocation2], %s298
        %p300 = pneg %p47
        %p301 = pneg %p44
        %s302 = sand.u32 %s26, 1
        %s303 = scalar_lea.sflag [#allocation6], %s302
        %s304 = sand.u32 %s60, 1
        %s305 = smul.addr %s304, 16
        %s306 = scalar_lea.vmem [#allocation5], %s305
        %p307 = pneg %p73
        %p308 = pneg %p70
        %p309 = pneg %p94
        %p310 = pneg %p91
        %p311 = pneg %p115
        %p312 = pneg %p112
        %p313 = pneg %p136
        %p314 = pneg %p133
        %p315 = pneg %p157
        %p316 = pneg %p154
        %p317 = pneg %p183
        %p318 = pneg %p180
        %s319 = sand.u32 %s170, 1
        %s320 = scalar_lea.sflag [#allocation4], %s319
        %s321 = sand.u32 %s170, 1
        %s322 = smul.addr %s321, 16
        %s323 = scalar_lea.vmem [#allocation8], %s322
        %s324 = smul.u32 2, %s26
        %s325 = smul.u32 2, %s26
        %s326 = smul.u32 2, %s26
        %v328 = vld [vmem:[%s277] sm:$0xff]
        %v329 = vld [vmem:[%s277 + $0x8] sm:$0xff]
        %v330 = vpack.c.bf16 %v329, %v328
        %v331 = vld [vmem:[#allocation7] sm:$0xff]
        %v332 = vld [vmem:[#allocation7 + $0x8] sm:$0xff]
        %v333 = vld [vmem:[#allocation7 + $0x10] sm:$0xff]
        %v334 = vld [vmem:[#allocation7 + $0x18] sm:$0xff]
        %v335 = vld [vmem:[#allocation7 + $0x20] sm:$0xff]
        %v336 = vld [vmem:[#allocation7 + $0x28] sm:$0xff]
        %v337 = vld [vmem:[#allocation7 + $0x30] sm:$0xff]
        %v338 = vld [vmem:[#allocation7 + $0x38] sm:$0xff]
        %v339 = vpack.c.bf16 %v332, %v331
        %v340 = vpack.c.bf16 %v334, %v333
        %v341 = vpack.c.bf16 %v336, %v335
        %v342 = vpack.c.bf16 %v338, %v337
        %v343 = vld [vmem:[%s3] sm:$0x1]
        %v345 = vlaneseq
        %v346 = vshrl.u32 %v345, 7
        %v347 = vsub.s32 0, %v346
        %v348 = vrot.slane %v343, %v347
        %vm350 = vcmask 523264
        %v352 = vsel %vm350, %v330, 0
        %354 = vmatprep.subr.bf16.mxu0 0
        %355 = vmatpush1.bf16.msra.mxu0 %v339
        %356 = vmatprep.subr.bf16.mxu0 0
        %357 = vmatpush1.bf16.msra.mxu0 %v340
        %358 = vmatprep.subr.bf16.mxu0 0
        %359 = vmatpush1.bf16.msra.mxu0 %v341
        %360 = vmatprep.subr.bf16.mxu0 0
        %361 = vmatpush1.bf16.msra.mxu0 %v342
        %362 = vmatprep.subr.bf16.mxu0 0
        %363 = vmatpush1.bf16.msra.mxu0 0
        %364 = vmatprep.subr.bf16.mxu0 0
        %365 = vmatpush1.bf16.msra.mxu0 0
        %366 = vmatprep.subr.bf16.mxu0 0
        %367 = vmatpush1.bf16.msra.mxu0 0
        %368 = vmatprep.subr.bf16.mxu0 0
        %369 = vmatpush1.bf16.msra.mxu0 0
        %370 = vmatprep.subr.bf16.mxu0 0
        %371 = vmatpush1.bf16.msra.mxu0 0
        %372 = vmatprep.subr.bf16.mxu0 0
        %373 = vmatpush1.bf16.msra.mxu0 0
        %374 = vmatprep.subr.bf16.mxu0 0
        %375 = vmatpush1.bf16.msra.mxu0 0
        %376 = vmatprep.subr.bf16.mxu0 0
        %377 = vmatpush1.bf16.msra.mxu0 0
        %378 = vmatprep.subr.bf16.mxu0 0
        %379 = vmatpush1.bf16.msra.mxu0 0
        %380 = vmatprep.subr.bf16.mxu0 0
        %381 = vmatpush1.bf16.msra.mxu0 0
        %382 = vmatprep.subr.bf16.mxu0 0
        %383 = vmatpush1.bf16.msra.mxu0 0
        %384 = vmatprep.subr.bf16.mxu0 0
        %385 = vmatpush1.bf16.msra.mxu0 0
        %386 = vmatprep.mubr.bf16.mxu0 0
        %387 = vmatmul.mubr.bf16.gmra.mrb[0].mxu0 %v352
        %v388 = vpop.f32.mrb[0].mxu0
        %v389 = vadd.f32 %v348, %v388
        %v390 = vpop.f32.mrb[0].mxu0
        %v391 = vpop.f32.mrb[0].mxu0
        %v392 = vadd.f32 %v348, %v391
        %v393 = vpop.f32.mrb[0].mxu0
        %394 = vdwg.mxu0
        %v395 = vld [vmem:[%s286] sm:$0xff]
        %v396 = vld [vmem:[%s286 + $0x8] sm:$0xff]
        %v397 = vadd.f32 %v389, %v395
        %v398 = vadd.f32 %v392, %v396
        %v399 = vld [vmem:[%s4] sm:$0x1]
        %v400 = vld [vmem:[%s5] sm:$0x1]
        %401 = vadd.xlane.f32.xlu0 %v397
        %v402 = vpop.xlane.xlu0 %401
        %403 = vadd.xlane.f32.xlu0 %v398
        %v404 = vpop.xlane.xlu0 %403
        %v405 = vmul.f32 %v402, 0.03125
        %v406 = vmul.f32 %v404, 0.03125
        %v407 = vsub.f32 %v397, %v405
        %v408 = vsub.f32 %v398, %v406
        %v409 = vlaneseq
        %v410 = vand.u32 %v409, 127
        %vm411 = vcmp.lt.s32.totalorder %v410, 32
        %v412 = vsel %vm411, %v407, 0.0
        %v413 = vsel %vm411, %v408, 0.0
        %v414 = vmul.f32 %v412, %v412
        %v415 = vmul.f32 %v413, %v413
        %416 = vadd.xlane.f32.xlu0 %v414
        %v417 = vpop.xlane.xlu0 %416
        %418 = vadd.xlane.f32.xlu0 %v415
        %v419 = vpop.xlane.xlu0 %418
        %v420 = vmul.f32 %v417, 0.03125
        %v421 = vmul.f32 %v419, 0.03125
        %v422 = vadd.f32 %v420, 1e-12
        %v423 = vadd.f32 %v421, 1e-12
        %v424 = vrsqrt.pop %v422
        %v425 = vrsqrt.pop %v423
        %v426 = vmul.f32 %v412, %v424
        %v427 = vmul.f32 %v413, %v425
        %v429 = vlaneseq
        %v430 = vshrl.u32 %v429, 7
        %v431 = vsub.s32 0, %v430
        %v432 = vrot.slane %v399, %v431
        %v434 = vmul.f32 %v426, %v432
        %v435 = vmul.f32 %v427, %v432
        %v437 = vlaneseq
        %v438 = vshrl.u32 %v437, 7
        %v439 = vsub.s32 0, %v438
        %v440 = vrot.slane %v400, %v439
        %v442 = vadd.f32 %v434, %v440
        %v443 = vadd.f32 %v435, %v440
        %444 = vst [vmem:[%s323] sm:$0xff] %v442
        %445 = vst [vmem:[%s323 + $0x8] sm:$0xff] %v443
        %s446 = sand.u32 %s170, 1
        %s447 = scalar_lea.sflag [#allocation4], %s446
        %s448 = sand.u32 %s170, 1
        %s449 = smul.addr %s448, 16
        %s450 = scalar_lea.vmem [#allocation8], %s449
        // Predicated region
        $region57: #{tpu_custom_call.1} parent=43 // pred_check
          %p451 = pneg %p180
        $region58: #{tpu_custom_call.1} parent=43 // pred_check_branch
          %453 = sbr.rel (%p451) target = $region60
        $region59: #{tpu_custom_call.1} parent=43 // pred_region
          %s454 = smul.u32 2, %s26
          %s456 = ssub.s32 256, 256
          %457 = vsyncadd %s447, %s456
          %s458 = smul.addr %s454, 128
          %s459 = scalar_lea.hbm %s6, %s458
          %s460 = sshll.u32 %s450, 4
          %s461 = int_to_ptr.vmem [resolvable:$true] %s460
          %466 = dma.vmem_to_hbm [thread:$0]  %s461, 256, %s459, %s447, 128, 128, 8
        $region60: #{tpu_custom_call.1} parent=43 // pred_fallthru
          _
      $region44: #{tpu_custom_call.1} parent=5 // pred_fallthru
        _
      %p467 = scmp.le.s32.totalorder 2, %s21
      // Predicated region
      $region61: #{tpu_custom_call.1} parent=5 // pred_check
        %p468 = pneg %p467
      $region62: #{tpu_custom_call.1} parent=5 // pred_check_branch
        %470 = sbr.rel (%p468) target = $region64
      $region63: #{tpu_custom_call.1} parent=5 // pred_region
        %s471 = ssub.s32 %s21, 2
        // Predicated region
        $region65: #{tpu_custom_call.1} parent=63 // pred_check
          %p472 = pneg %p186
        $region66: #{tpu_custom_call.1} parent=63 // pred_check_branch
          %474 = sbr.rel (%p472) target = $region68
        $region67: #{tpu_custom_call.1} parent=63 // pred_region
          %s475 = sand.u32 %s171, 1
          %s476 = scalar_lea.sflag [#allocation4], %s475
          %s477 = sand.u32 %s171, 1
          %s478 = smul.addr %s477, 16
          %s479 = scalar_lea.vmem [#allocation8], %s478
          %480 = dma.done %s476, 256
        $region68: #{tpu_custom_call.1} parent=63 // pred_fallthru
          _
      $region64: #{tpu_custom_call.1} parent=5 // pred_fallthru
        _
    $region6: #{tpu_custom_call.1} parent=1 // loop_footer
      %s25 = sadd.s32 1, %s21
    $region7: #{tpu_custom_call.1} parent=1 // loop_footer_branch
      %20 = sbr.rel target = $region3
    $region8: #{tpu_custom_call.1} parent=1 // loop_exit
      _
    %481 = vsyncpa [#allocation3], 1
    %s482 = scalar_lea.sflag [#allocation3], 1
    %483 = vsyncpa %s482, 1
    %484 = vsyncpa [#allocation6], 1
    %s485 = scalar_lea.sflag [#allocation6], 1
    %486 = vsyncpa %s485, 1
    %487 = vsyncpa [#allocation4], 1
    %s488 = scalar_lea.sflag [#allocation4], 1
    %489 = vsyncpa %s488, 1

</llo_original>
